<compile_context>
chip_gen: v6e
topology: v6e:2x2x1
jax: 0.10.0
libtpu: 0.0.40
codegen_flags: <defaults>
</compile_context>

<pallas_src>
import jax
import jax.numpy as jnp
from jax import lax
from jax.experimental import pallas as pl
from jax.experimental.pallas import tpu as pltpu

# ----------------------------- sizes (small, consistent with the module) ------
BATCH = 2
NUM_ARMY = 8
ARMY_DIM = 16
NUM_INST = 8          # nn.Embedding(num_inst, pos_dim); must equal num_hist for the concat
NUM_HIST = NUM_INST
SENT_LEN = 6
VOCAB = 20            # encoder token vocabulary (synthetic)
POS_DIM = 8
ENC_DIM = 16          # encoder.out_dim (synthetic)
MAX_HIST_DIFF = 10
OUT_DIM = POS_DIM * 2 + ENC_DIM   # = 32


# ----------------------------- Pallas kernel ----------------------------------
def _attention_kernel(army_ref, hist_ref, hist_t_ref, w_ref, b_ref, inst_ref, sum_ref):
    # army_ref   : [B*A, Din]  (flattened in the wrapper)
    # hist_ref   : [B, H, D]
    # hist_t_ref : [B, D, H]   (pre-transposed in the wrapper; avoids in-kernel XLU transpose)
    # w_ref      : [Din, D]    (weight-normed Linear weight, pre-transposed)
    # b_ref      : [1, D]
    # inst_ref   : [B, A, D]
    # sum_ref    : [B, D]
    BA, Din = army_ref.shape
    B, H, D = hist_ref.shape
    A = BA // B

    hist = hist_ref[...]                                        # [B, H, D]
    hist_t = hist_t_ref[...]                                    # [B, D, H]

    # --- projection fused across the whole batch: one [B*A, Din] @ [Din, D] ---
    proj = jnp.dot(army_ref[...], w_ref[...],
                   preferred_element_type=jnp.float32) + b_ref[...]
    proj = jnp.maximum(proj, 0.0)                               # ReLU, [B*A, D]
    # leading-dim split only, lane dim untouched -> zero-copy relayout
    proj = proj.reshape(B, A, D)

    # --- attention scores: score[b,a,h] = sum_d proj[b,a,d] * hist[b,h,d] ---
    # canonical contraction (lhs last dim x rhs second-to-last dim), no transpose needed
    score = lax.dot_general(
        proj, hist_t,
        dimension_numbers=(((2,), (1,)), ((0,), (0,))),
        preferred_element_type=jnp.float32)                     # [B, A, H]

    # --- softmax over history (exact divide; kernel is latency-bound, not VALU-bound) ---
    m = jnp.max(score, axis=-1, keepdims=True)
    e = jnp.exp(score - m)
    att = e / jnp.sum(e, axis=-1, keepdims=True)                # [B, A, H]

    # --- weighted sum: inst[b,a,d] = sum_h att[b,a,h] * hist[b,h,d] ---
    inst = lax.dot_general(
        att, hist,
        dimension_numbers=(((2,), (1,)), ((0,), (0,))),
        preferred_element_type=jnp.float32)                     # [B, A, D]

    inst_ref[...] = inst
    sum_ref[...] = hist[:, H - 1, :]                            # sum_inst = hist_feat[:, -1]


def hist_attention_pallas(army_flat, hist_feat, hist_feat_t, w_t, bias):
    """army_flat [B*A,Din], hist_feat [B,H,D], hist_feat_t [B,D,H], w_t [Din,D], bias [1,D]
       -> (inst_feat [B,A,D], sum_inst [B,D])."""
    B, H, D = hist_feat.shape
    BA, Din = army_flat.shape
    A = BA // B

    vmem = pltpu.MemorySpace.VMEM
    cost = pl.CostEstimate(
        flops=2 * BA * Din * D + 4 * BA * H * D,            # projection + score + weighted sum
        transcendentals=BA * H,                             # exp in softmax
        bytes_accessed=4 * (army_flat.size + hist_feat.size + hist_feat_t.size
                            + w_t.size + bias.size + BA * D + B * D),
    )

    inst_feat, sum_inst = pl.pallas_call(
        _attention_kernel,
        out_shape=(
            jax.ShapeDtypeStruct((B, A, D), jnp.float32),
            jax.ShapeDtypeStruct((B, D), jnp.float32),
        ),
        # no grid: whole problem resides in VMEM for a single invocation
        in_specs=[
            pl.BlockSpec(memory_space=vmem),
            pl.BlockSpec(memory_space=vmem),
            pl.BlockSpec(memory_space=vmem),
            pl.BlockSpec(memory_space=vmem),
            pl.BlockSpec(memory_space=vmem),
        ],
        out_specs=(
            pl.BlockSpec(memory_space=vmem),
            pl.BlockSpec(memory_space=vmem),
        ),
        cost_estimate=cost,
    )(army_flat, hist_feat, hist_feat_t, w_t, bias)
    return inst_feat, sum_inst


# ----------------------------- module (params + glue) -------------------------
def init_params(key):
    ks = jax.random.split(key, 5)
    params = {
        # synthetic sentence encoder: token embedding table
        "tok_emb": jax.random.normal(ks[0], (VOCAB, ENC_DIM), jnp.float32) * 0.1,
        # nn.Embedding(num_inst, pos_dim)
        "pos_emb": jax.random.normal(ks[1], (NUM_INST, POS_DIM), jnp.float32) * 0.1,
        # nn.Embedding(max_hist_diff + 1, pos_dim)
        "diff_emb": jax.random.normal(ks[2], (MAX_HIST_DIFF + 1, POS_DIM), jnp.float32) * 0.1,
        # weight_norm(nn.Linear(army_dim, out_dim), dim=None):  v [out,in], g scalar
        "proj_v": jax.random.normal(ks[3], (OUT_DIM, ARMY_DIM), jnp.float32) * 0.1,
        "proj_b": jax.random.normal(ks[4], (OUT_DIM,), jnp.float32) * 0.1,
    }
    # at init g = ||v||_F (PyTorch weight_norm dim=None)
    params["proj_g"] = jnp.linalg.norm(params["proj_v"])
    return params


def sentence_encoder(params, hist_inst_flat, hist_inst_len_flat):
    """Masked-mean bag-of-embeddings encoder. [BH, L] int -> [BH, ENC_DIM]."""
    emb = params["tok_emb"][hist_inst_flat]                          # [BH, L, E]
    L = hist_inst_flat.shape[1]
    mask = (jnp.arange(L)[None, :] < hist_inst_len_flat[:, None]).astype(jnp.float32)
    summed = jnp.sum(emb * mask[:, :, None], axis=1)                 # [BH, E]
    denom = jnp.maximum(hist_inst_len_flat.astype(jnp.float32), 1.0)[:, None]
    return summed / denom


def hist_instruction_encoder_forward(params, army_feat, hist_inst, hist_inst_len, hist_inst_diff):
    batch, num_hist = hist_inst.shape[:2]
    num_army = army_feat.shape[1]
    # pos_emb broadcast + concat assumes num_hist == num_inst (same as the PyTorch module)
    assert num_hist == params["pos_emb"].shape[0], "num_hist must equal num_inst for the concat"

    # encoder over flattened history instructions
    hist_inst_flat = hist_inst.reshape(batch * num_hist, -1)
    len_flat = hist_inst_len.reshape(batch * num_hist)
    hist_enc = sentence_encoder(params, hist_inst_flat, len_flat)
    hist_enc = hist_enc.reshape(batch, num_hist, -1)                 # [B, H, ENC_DIM]

    # positional + diff embeddings
    pos_emb = jnp.broadcast_to(params["pos_emb"][None], (batch, NUM_INST, POS_DIM))
    diff_clamped = jnp.minimum(hist_inst_diff, MAX_HIST_DIFF)
    diff_emb = params["diff_emb"][diff_clamped]                      # [B, H, POS_DIM]

    hist_feat = jnp.concatenate([hist_enc, pos_emb, diff_emb], axis=2)   # [B, H, OUT_DIM]
    hist_feat_t = jnp.transpose(hist_feat, (0, 2, 1))                    # [B, OUT_DIM, H]

    # weight_norm (dim=None): W = g * v / ||v||_F
    w = params["proj_g"] * params["proj_v"] / jnp.linalg.norm(params["proj_v"])
    w_t = w.T                                                        # [ARMY_DIM, OUT_DIM]
    bias = params["proj_b"][None, :]                                 # [1, OUT_DIM]

    # free XLA metadata reshape; keeps the projection fused as one matmul in-kernel
    army_flat = army_feat.reshape(batch * num_army, -1)              # [B*A, ARMY_DIM]

    # hot path in Pallas: proj+ReLU, attention score, softmax, weighted sum, sum_inst slice
    inst_feat, sum_inst = hist_attention_pallas(army_flat, hist_feat, hist_feat_t, w_t, bias)
    return inst_feat, sum_inst


# ----------------------------- pure-JAX reference (for sanity) ----------------
def _reference_attention(army_feat, hist_feat, w_t, bias):
    proj = jnp.maximum(jnp.einsum("bad,de->bae", army_feat, w_t) + bias[None], 0.0)
    dot = jnp.einsum("bae,bhe->bah", proj, hist_feat)
    att = jax.nn.softmax(dot, axis=2)
    return jnp.einsum("bah,bhe->bae", att, hist_feat)


if __name__ == "__main__":
    key = jax.random.PRNGKey(0)
    kp, k1, k2, k3, k4 = jax.random.split(key, 5)
    params = init_params(kp)

    army_feat = jax.random.normal(k1, (BATCH, NUM_ARMY, ARMY_DIM), jnp.float32)
    hist_inst = jax.random.randint(k2, (BATCH, NUM_HIST, SENT_LEN), 0, VOCAB, jnp.int32)
    hist_inst_len = jax.random.randint(k3, (BATCH, NUM_HIST), 1, SENT_LEN + 1, jnp.int32)
    hist_inst_diff = jax.random.randint(k4, (BATCH, NUM_HIST), 0, 15, jnp.int32)

    inst_feat, sum_inst = hist_instruction_encoder_forward(
        params, army_feat, hist_inst, hist_inst_len, hist_inst_diff
    )
    jax.block_until_ready(inst_feat)
    jax.block_until_ready(sum_inst)

    # sanity check against pure-JAX reference
    hist_inst_flat = hist_inst.reshape(BATCH * NUM_HIST, -1)
    hist_enc = sentence_encoder(params, hist_inst_flat, hist_inst_len.reshape(-1))
    hist_enc = hist_enc.reshape(BATCH, NUM_HIST, -1)
    pos = jnp.broadcast_to(params["pos_emb"][None], (BATCH, NUM_INST, POS_DIM))
    diff = params["diff_emb"][jnp.minimum(hist_inst_diff, MAX_HIST_DIFF)]
    hist_feat_ref = jnp.concatenate([hist_enc, pos, diff], axis=2)
    w = params["proj_g"] * params["proj_v"] / jnp.linalg.norm(params["proj_v"])
    ref_inst = _reference_attention(army_feat, hist_feat_ref, w.T, params["proj_b"])
    ref_sum = hist_feat_ref[:, -1]

    assert inst_feat.shape == (BATCH, NUM_ARMY, OUT_DIM)
    assert sum_inst.shape == (BATCH, OUT_DIM)
    # exact softmax divide -> tight tolerance
    assert jnp.allclose(inst_feat, ref_inst, rtol=1e-4, atol=1e-4)
    assert jnp.allclose(sum_inst, ref_sum, rtol=1e-5, atol=1e-5)

    print("KERNEL_OK")
</pallas_src>

<mosaic_0001>
module attributes {stable_mosaic.version = 11 : i64} {
  func.func @_attention_kernel(%arg0: memref<16x16xf32, #tpu.memory_space<vmem>>, %arg1: memref<2x8x32xf32, #tpu.memory_space<vmem>>, %arg2: memref<2x32x8xf32, #tpu.memory_space<vmem>>, %arg3: memref<16x32xf32, #tpu.memory_space<vmem>>, %arg4: memref<1x32xf32, #tpu.memory_space<vmem>>, %arg5: memref<2x8x32xf32, #tpu.memory_space<vmem>>, %arg6: memref<2x32xf32, #tpu.memory_space<vmem>>) attributes {dimension_semantics = [], scalar_prefetch = 0 : i64, scratch_operands = 0 : i64, tpu.core_type = #tpu.core_type<tc>} {
    %c0 = arith.constant 0 : index
    %c0_0 = arith.constant 0 : index
    %c0_1 = arith.constant 0 : index
    %0 = vector.load %arg1[%c0, %c0_0, %c0_1] : memref<2x8x32xf32, #tpu.memory_space<vmem>>, vector<2x8x32xf32>
    %c0_2 = arith.constant 0 : index
    %c0_3 = arith.constant 0 : index
    %c0_4 = arith.constant 0 : index
    %1 = vector.load %arg2[%c0_2, %c0_3, %c0_4] : memref<2x32x8xf32, #tpu.memory_space<vmem>>, vector<2x32x8xf32>
    %c0_5 = arith.constant 0 : index
    %c0_6 = arith.constant 0 : index
    %2 = vector.load %arg0[%c0_5, %c0_6] : memref<16x16xf32, #tpu.memory_space<vmem>>, vector<16x16xf32>
    %c0_7 = arith.constant 0 : index
    %c0_8 = arith.constant 0 : index
    %3 = vector.load %arg3[%c0_7, %c0_8] : memref<16x32xf32, #tpu.memory_space<vmem>>, vector<16x32xf32>
    %cst = arith.constant dense<0.000000e+00> : vector<16x32xf32>
    %4 = tpu.matmul %2, %3, %cst {dimension_numbers = #tpu.dot_dimension_numbers<[1], [0], [0], [1], [0, 0, 1, 1], [], []>} : vector<16x16xf32>, vector<16x32xf32>, vector<16x32xf32> -> vector<16x32xf32>
    %c0_9 = arith.constant 0 : index
    %c0_10 = arith.constant 0 : index
    %5 = vector.load %arg4[%c0_9, %c0_10] : memref<1x32xf32, #tpu.memory_space<vmem>>, vector<1x32xf32>
    %6 = vector.broadcast %5 : vector<1x32xf32> to vector<16x32xf32>
    %7 = arith.addf %4, %6 : vector<16x32xf32>
    %cst_11 = arith.constant 0.000000e+00 : f32
    %8 = vector.broadcast %cst_11 : f32 to vector<16x32xf32>
    %9 = arith.maximumf %7, %8 : vector<16x32xf32>
    %10 = vector.shape_cast %9 : vector<16x32xf32> to vector<2x8x32xf32>
    %cst_12 = arith.constant dense<0.000000e+00> : vector<2x8x8xf32>
    %11 = tpu.matmul %10, %1, %cst_12 {dimension_numbers = #tpu.dot_dimension_numbers<[2], [1], [1], [2], [0, 0, 0, 1, 1, 2], [0], [0]>} : vector<2x8x32xf32>, vector<2x32x8xf32>, vector<2x8x8xf32> -> vector<2x8x8xf32>
    %cst_13 = arith.constant dense<0xFF800000> : vector<2x8xf32>
    %12 = vector.multi_reduction <maximumf>, %11, %cst_13 [2] : vector<2x8x8xf32> to vector<2x8xf32>
    %13 = vector.shape_cast %12 : vector<2x8xf32> to vector<2x8x1xf32>
    %14 = vector.broadcast %13 : vector<2x8x1xf32> to vector<2x8x8xf32>
    %15 = arith.subf %11, %14 : vector<2x8x8xf32>
    %16 = math.exp %15 : vector<2x8x8xf32>
    %cst_14 = arith.constant dense<0.000000e+00> : vector<2x8xf32>
    %17 = vector.multi_reduction <add>, %16, %cst_14 [2] : vector<2x8x8xf32> to vector<2x8xf32>
    %18 = vector.shape_cast %17 : vector<2x8xf32> to vector<2x8x1xf32>
    %19 = vector.broadcast %18 : vector<2x8x1xf32> to vector<2x8x8xf32>
    %20 = arith.divf %16, %19 : vector<2x8x8xf32>
    %cst_15 = arith.constant dense<0.000000e+00> : vector<2x8x32xf32>
    %21 = tpu.matmul %20, %0, %cst_15 {dimension_numbers = #tpu.dot_dimension_numbers<[2], [1], [1], [2], [0, 0, 0, 1, 1, 2], [0], [0]>} : vector<2x8x8xf32>, vector<2x8x32xf32>, vector<2x8x32xf32> -> vector<2x8x32xf32>
    %c0_16 = arith.constant 0 : index
    %c0_17 = arith.constant 0 : index
    %c0_18 = arith.constant 0 : index
    %22 = vector.load %arg5[%c0_16, %c0_17, %c0_18] : memref<2x8x32xf32, #tpu.memory_space<vmem>>, vector<2x8x32xf32>
    tpu.vector_store %arg5[%c0_16, %c0_17, %c0_18], %21 {strides = array<i32>} : memref<2x8x32xf32, #tpu.memory_space<vmem>>, vector<2x8x32xf32>,
    %23 = vector.extract_strided_slice %0 {offsets = [0, 7, 0], sizes = [2, 1, 32], strides = [1, 1, 1]} : vector<2x8x32xf32> to vector<2x1x32xf32>
    %24 = vector.shape_cast %23 : vector<2x1x32xf32> to vector<2x32xf32>
    %c0_19 = arith.constant 0 : index
    %c0_20 = arith.constant 0 : index
    %25 = vector.load %arg6[%c0_19, %c0_20] : memref<2x32xf32, #tpu.memory_space<vmem>>, vector<2x32xf32>
    tpu.vector_store %arg6[%c0_19, %c0_20], %24 {strides = array<i32>} : memref<2x32xf32, #tpu.memory_space<vmem>>, vector<2x32xf32>,
    return
  }
}

</mosaic_0001>

<llo_original>
// kernel: tpu_custom_call.1
$region0: #{tpu_custom_call.1}
  #allocation0 [shape = 'u32[]', space=smem, size = 0x4, offset = 0x4, fixed_abs, tag = 'smem constant byte address 0x4 - core index']
  #allocation1 [shape = 'u32[144,128]{1,0:T(1,128)}', space=vmem, size = 0x12000, scoped, tag = 'internal scratch']
  %s0 = inlined_call_operand.vmem [shape: f32[16,16], index: 0, kind: input, shape index: {}]
  %s1 = inlined_call_operand.vmem [shape: f32[2,8,32], index: 1, kind: input, shape index: {}]
  %s2 = inlined_call_operand.vmem [shape: f32[2,32,8], index: 2, kind: input, shape index: {}]
  %s3 = inlined_call_operand.vmem [shape: f32[16,32], index: 3, kind: input, shape index: {}]
  %s4 = inlined_call_operand.vmem [shape: f32[1,32], index: 4, kind: input, shape index: {}]
  %s5 = inlined_call_operand.hbm [shape: f32[2,8,32], index: 5, kind: output, shape index: {0}]
  %s6 = inlined_call_operand.hbm [shape: f32[2,32], index: 6, kind: output, shape index: {1}]
  %7 = xla_tuple %s5, %s6
  %s8 = sld [smem:[#allocation0]]
  $region38: #{tpu_custom_call.1} parent=0
    _
  %s10 = ssub.s32 1, %s8
  %s11 = scalar_select 0, %s10, %s8
  $region1: #{tpu_custom_call.1} parent=0
    #allocation2 [shape = 'u8[8192]{0}', space=vmem, size = 0x2000, scoped, tag = 'output window, operand 0, single buffered']
    #allocation3 [shape = 's32[1]{0}', space=sflag, size = 0x4, scoped, tag = 'scoped memory for tpu_custom_call.1']
    #allocation4 [shape = 'u8[1024]{0}', space=vmem, size = 0x400, scoped, tag = 'output window, operand 1, single buffered']
    #allocation5 [shape = 's32[1]{0}', space=sflag, size = 0x4, scoped, tag = 'scoped memory for tpu_custom_call.1']
    %12 = vsyncpa [#allocation3], 0
    %13 = vsyncpa [#allocation5], 0
    // Predicated region
    $region2: #{tpu_custom_call.1} parent=1 // pred_check
      _
    $region3: #{tpu_custom_call.1} parent=1 // pred_check_branch
      %15 = sbr.rel (0) target = $region5
    $region4: #{tpu_custom_call.1} parent=1 // pred_region
      _
    $region5: #{tpu_custom_call.1} parent=1 // pred_fallthru
      _
    // Predicated region
    $region6: #{tpu_custom_call.1} parent=1 // pred_check
      _
    $region7: #{tpu_custom_call.1} parent=1 // pred_check_branch
      %17 = sbr.rel (0) target = $region9
    $region8: #{tpu_custom_call.1} parent=1 // pred_region
      _
    $region9: #{tpu_custom_call.1} parent=1 // pred_fallthru
      _
    // Predicated region
    $region10: #{tpu_custom_call.1} parent=1 // pred_check
      _
    $region11: #{tpu_custom_call.1} parent=1 // pred_check_branch
      %19 = sbr.rel (0) target = $region13
    $region12: #{tpu_custom_call.1} parent=1 // pred_region
      _
    $region13: #{tpu_custom_call.1} parent=1 // pred_fallthru
      _
    // Predicated region
    $region14: #{tpu_custom_call.1} parent=1 // pred_check
      _
    $region15: #{tpu_custom_call.1} parent=1 // pred_check_branch
      %21 = sbr.rel (0) target = $region17
    $region16: #{tpu_custom_call.1} parent=1 // pred_region
      _
    $region17: #{tpu_custom_call.1} parent=1 // pred_fallthru
      _
    // Predicated region
    $region18: #{tpu_custom_call.1} parent=1 // pred_check
      _
    $region19: #{tpu_custom_call.1} parent=1 // pred_check_branch
      %23 = sbr.rel (0) target = $region21
    $region20: #{tpu_custom_call.1} parent=1 // pred_region
      _
    $region21: #{tpu_custom_call.1} parent=1 // pred_fallthru
      _
    %v24 = vld [vmem:[%s1] sm:$0xff]
    %v25 = vld [vmem:[%s1 + $0x8] sm:$0xff]
    %v26 = vld [vmem:[%s2] sm:$0xff]
    %v27 = vld [vmem:[%s2 + $0x8] sm:$0xff]
    %v28 = vld [vmem:[%s2 + $0x10] sm:$0xff]
    %v29 = vld [vmem:[%s2 + $0x18] sm:$0xff]
    %v30 = vld [vmem:[%s2 + $0x20] sm:$0xff]
    %v31 = vld [vmem:[%s2 + $0x28] sm:$0xff]
    %v32 = vld [vmem:[%s2 + $0x30] sm:$0xff]
    %v33 = vld [vmem:[%s2 + $0x38] sm:$0xff]
    %v34 = vld [vmem:[%s0] sm:$0xff]
    %v35 = vld [vmem:[%s0 + $0x8] sm:$0xff]
    %v36 = vld [vmem:[%s3] sm:$0xff]
    %v37 = vld [vmem:[%s3 + $0x8] sm:$0xff]
    %v38 = vld [vmem:[%s4] sm:$0x1]
    %v40 = vlaneseq
    %v41 = vshrl.u32 %v40, 7
    %v42 = vsub.s32 0, %v41
    %v43 = vrot.slane %v38, %v42
    %vm45 = vcmask 130048
    %v47 = vsel %vm45, %v34, 0
    %v50 = vsel %vm45, %v35, 0
    %52 = vmatprep.subr.mxu0 0.0
    %53 = vmatpush1.msra.mxu0 0.0
    %54 = vmatprep.subr.mxu0 0.0
    %55 = vmatpush1.msra.mxu0 0.0
    %56 = vmatprep.subr.mxu0 0.0
    %57 = vmatpush1.msra.mxu0 0.0
    %58 = vmatprep.subr.mxu0 0.0
    %59 = vmatpush1.msra.mxu0 0.0
    %60 = vmatprep.subr.mxu0 0.0
    %61 = vmatpush1.msra.mxu0 0.0
    %62 = vmatprep.subr.mxu0 0.0
    %63 = vmatpush1.msra.mxu0 0.0
    %64 = vmatprep.subr.mxu0 0.0
    %65 = vmatpush1.msra.mxu0 0.0
    %66 = vmatprep.subr.mxu0 0.0
    %67 = vmatpush1.msra.mxu0 0.0
    %68 = vmatprep.subr.mxu0 0.0
    %69 = vmatpush1.msra.mxu0 0.0
    %70 = vmatprep.subr.mxu0 0.0
    %71 = vmatpush1.msra.mxu0 0.0
    %72 = vmatprep.subr.mxu0 0.0
    %73 = vmatpush1.msra.mxu0 0.0
    %74 = vmatprep.subr.mxu0 0.0
    %75 = vmatpush1.msra.mxu0 0.0
    %76 = vmatprep.subr.mxu0 0.0
    %77 = vmatpush1.msra.mxu0 0.0
    %78 = vmatprep.subr.mxu0 0.0
    %79 = vmatpush1.msra.mxu0 0.0
    %80 = vmatprep.subr.mxu0 0.0
    %81 = vmatpush1.msra.mxu0 %v37
    %82 = vmatprep.subr.mxu0 0.0
    %83 = vmatpush1.msra.mxu0 %v36
    %84 = vmatprep.subr.mxu0 0.0
    %85 = vmatpush2.msra.mxu0 0.0
    %86 = vmatprep.subr.mxu0 0.0
    %87 = vmatpush2.msra.mxu0 0.0
    %88 = vmatprep.subr.mxu0 0.0
    %89 = vmatpush2.msra.mxu0 0.0
    %90 = vmatprep.subr.mxu0 0.0
    %91 = vmatpush2.msra.mxu0 0.0
    %92 = vmatprep.subr.mxu0 0.0
    %93 = vmatpush2.msra.mxu0 0.0
    %94 = vmatprep.subr.mxu0 0.0
    %95 = vmatpush2.msra.mxu0 0.0
    %96 = vmatprep.subr.mxu0 0.0
    %97 = vmatpush2.msra.mxu0 0.0
    %98 = vmatprep.subr.mxu0 0.0
    %99 = vmatpush2.msra.mxu0 0.0
    %100 = vmatprep.subr.mxu0 0.0
    %101 = vmatpush2.msra.mxu0 0.0
    %102 = vmatprep.subr.mxu0 0.0
    %103 = vmatpush2.msra.mxu0 0.0
    %104 = vmatprep.subr.mxu0 0.0
    %105 = vmatpush2.msra.mxu0 0.0
    %106 = vmatprep.subr.mxu0 0.0
    %107 = vmatpush2.msra.mxu0 0.0
    %108 = vmatprep.subr.mxu0 0.0
    %109 = vmatpush2.msra.mxu0 0.0
    %110 = vmatprep.subr.mxu0 0.0
    %111 = vmatpush2.msra.mxu0 0.0
    %112 = vmatprep.subr.mxu0 0.0
    %113 = vmatpush2.msra.mxu0 0.0
    %114 = vmatprep.subr.mxu0 0.0
    %115 = vmatpush2.msra.mxu0 0.0
    %116 = vmatprep.mubr.f32.mxu0 0.0
    %117 = vmatmul.mubr.f32.gmra.mxu0 %v47
    %v118 = vpop.f32.mrf.mxu0
    %v119 = vadd.f32 %v43, %v118
    %v120 = vpop.f32.mrf.mxu0
    %121 = vmatprep.mubr.f32.mxu0 0.0
    %122 = vmatmul.mubr.f32.gmra.mxu0 %v50
    %v123 = vpop.f32.mrf.mxu0
    %v124 = vadd.f32 %v43, %v123
    %v125 = vpop.f32.mrf.mxu0
    %126 = vdwg.mxu0
    %v127 = vmax.f32 %v119, 0.0
    %v128 = vmax.f32 %v124, 0.0
    %vm129 = vcmask 261120
    %v131 = vsel %vm129, %v127, 0
    %133 = vmatprep.subr.mxu0 0.0
    %134 = vmatpush1.msra.mxu0 0.0
    %135 = vmatprep.subr.mxu0 0.0
    %136 = vmatpush1.msra.mxu0 0.0
    %137 = vmatprep.subr.mxu0 0.0
    %138 = vmatpush1.msra.mxu0 0.0
    %139 = vmatprep.subr.mxu0 0.0
    %140 = vmatpush1.msra.mxu0 0.0
    %141 = vmatprep.subr.mxu0 0.0
    %142 = vmatpush1.msra.mxu0 0.0
    %143 = vmatprep.subr.mxu0 0.0
    %144 = vmatpush1.msra.mxu0 0.0
    %145 = vmatprep.subr.mxu0 0.0
    %146 = vmatpush1.msra.mxu0 0.0
    %147 = vmatprep.subr.mxu0 0.0
    %148 = vmatpush1.msra.mxu0 0.0
    %149 = vmatprep.subr.mxu0 0.0
    %150 = vmatpush1.msra.mxu0 0.0
    %151 = vmatprep.subr.mxu0 0.0
    %152 = vmatpush1.msra.mxu0 0.0
    %153 = vmatprep.subr.mxu0 0.0
    %154 = vmatpush1.msra.mxu0 0.0
    %155 = vmatprep.subr.mxu0 0.0
    %156 = vmatpush1.msra.mxu0 0.0
    %157 = vmatprep.subr.mxu0 0.0
    %158 = vmatpush1.msra.mxu0 %v29
    %159 = vmatprep.subr.mxu0 0.0
    %160 = vmatpush1.msra.mxu0 %v28
    %161 = vmatprep.subr.mxu0 0.0
    %162 = vmatpush1.msra.mxu0 %v27
    %163 = vmatprep.subr.mxu0 0.0
    %164 = vmatpush1.msra.mxu0 %v26
    %165 = vmatprep.subr.mxu0 0.0
    %166 = vmatpush2.msra.mxu0 0.0
    %167 = vmatprep.subr.mxu0 0.0
    %168 = vmatpush2.msra.mxu0 0.0
    %169 = vmatprep.subr.mxu0 0.0
    %170 = vmatpush2.msra.mxu0 0.0
    %171 = vmatprep.subr.mxu0 0.0
    %172 = vmatpush2.msra.mxu0 0.0
    %173 = vmatprep.subr.mxu0 0.0
    %174 = vmatpush2.msra.mxu0 0.0
    %175 = vmatprep.subr.mxu0 0.0
    %176 = vmatpush2.msra.mxu0 0.0
    %177 = vmatprep.subr.mxu0 0.0
    %178 = vmatpush2.msra.mxu0 0.0
    %179 = vmatprep.subr.mxu0 0.0
    %180 = vmatpush2.msra.mxu0 0.0
    %181 = vmatprep.subr.mxu0 0.0
    %182 = vmatpush2.msra.mxu0 0.0
    %183 = vmatprep.subr.mxu0 0.0
    %184 = vmatpush2.msra.mxu0 0.0
    %185 = vmatprep.subr.mxu0 0.0
    %186 = vmatpush2.msra.mxu0 0.0
    %187 = vmatprep.subr.mxu0 0.0
    %188 = vmatpush2.msra.mxu0 0.0
    %189 = vmatprep.subr.mxu0 0.0
    %190 = vmatpush2.msra.mxu0 0.0
    %191 = vmatprep.subr.mxu0 0.0
    %192 = vmatpush2.msra.mxu0 0.0
    %193 = vmatprep.subr.mxu0 0.0
    %194 = vmatpush2.msra.mxu0 0.0
    %195 = vmatprep.subr.mxu0 0.0
    %196 = vmatpush2.msra.mxu0 0.0
    %197 = vmatprep.mubr.f32.mxu0 0.0
    %198 = vmatmul.mubr.f32.gmra.mxu0 %v131
    %v199 = vpop.f32.mrf.mxu0
    %v200 = vadd.f32 0.0, %v199
    %v201 = vpop.f32.mrf.mxu0
    %202 = vdwg.mxu0
    %v204 = vsel %vm129, %v128, 0
    %206 = vmatprep.subr.mxu0 0.0
    %207 = vmatpush1.msra.mxu0 0.0
    %208 = vmatprep.subr.mxu0 0.0
    %209 = vmatpush1.msra.mxu0 0.0
    %210 = vmatprep.subr.mxu0 0.0
    %211 = vmatpush1.msra.mxu0 0.0
    %212 = vmatprep.subr.mxu0 0.0
    %213 = vmatpush1.msra.mxu0 0.0
    %214 = vmatprep.subr.mxu0 0.0
    %215 = vmatpush1.msra.mxu0 0.0
    %216 = vmatprep.subr.mxu0 0.0
    %217 = vmatpush1.msra.mxu0 0.0
    %218 = vmatprep.subr.mxu0 0.0
    %219 = vmatpush1.msra.mxu0 0.0
    %220 = vmatprep.subr.mxu0 0.0
    %221 = vmatpush1.msra.mxu0 0.0
    %222 = vmatprep.subr.mxu0 0.0
    %223 = vmatpush1.msra.mxu0 0.0
    %224 = vmatprep.subr.mxu0 0.0
    %225 = vmatpush1.msra.mxu0 0.0
    %226 = vmatprep.subr.mxu0 0.0
    %227 = vmatpush1.msra.mxu0 0.0
    %228 = vmatprep.subr.mxu0 0.0
    %229 = vmatpush1.msra.mxu0 0.0
    %230 = vmatprep.subr.mxu0 0.0
    %231 = vmatpush1.msra.mxu0 %v33
    %232 = vmatprep.subr.mxu0 0.0
    %233 = vmatpush1.msra.mxu0 %v32
    %234 = vmatprep.subr.mxu0 0.0
    %235 = vmatpush1.msra.mxu0 %v31
    %236 = vmatprep.subr.mxu0 0.0
    %237 = vmatpush1.msra.mxu0 %v30
    %238 = vmatprep.subr.mxu0 0.0
    %239 = vmatpush2.msra.mxu0 0.0
    %240 = vmatprep.subr.mxu0 0.0
    %241 = vmatpush2.msra.mxu0 0.0
    %242 = vmatprep.subr.mxu0 0.0
    %243 = vmatpush2.msra.mxu0 0.0
    %244 = vmatprep.subr.mxu0 0.0
    %245 = vmatpush2.msra.mxu0 0.0
    %246 = vmatprep.subr.mxu0 0.0
    %247 = vmatpush2.msra.mxu0 0.0
    %248 = vmatprep.subr.mxu0 0.0
    %249 = vmatpush2.msra.mxu0 0.0
    %250 = vmatprep.subr.mxu0 0.0
    %251 = vmatpush2.msra.mxu0 0.0
    %252 = vmatprep.subr.mxu0 0.0
    %253 = vmatpush2.msra.mxu0 0.0
    %254 = vmatprep.subr.mxu0 0.0
    %255 = vmatpush2.msra.mxu0 0.0
    %256 = vmatprep.subr.mxu0 0.0
    %257 = vmatpush2.msra.mxu0 0.0
    %258 = vmatprep.subr.mxu0 0.0
    %259 = vmatpush2.msra.mxu0 0.0
    %260 = vmatprep.subr.mxu0 0.0
    %261 = vmatpush2.msra.mxu0 0.0
    %262 = vmatprep.subr.mxu0 0.0
    %263 = vmatpush2.msra.mxu0 0.0
    %264 = vmatprep.subr.mxu0 0.0
    %265 = vmatpush2.msra.mxu0 0.0
    %266 = vmatprep.subr.mxu0 0.0
    %267 = vmatpush2.msra.mxu0 0.0
    %268 = vmatprep.subr.mxu0 0.0
    %269 = vmatpush2.msra.mxu0 0.0
    %270 = vmatprep.mubr.f32.mxu0 0.0
    %271 = vmatmul.mubr.f32.gmra.mxu0 %v204
    %v272 = vpop.f32.mrf.mxu0
    %v273 = vadd.f32 0.0, %v272
    %v274 = vpop.f32.mrf.mxu0
    %275 = vdwg.mxu0
    %vm276 = vcmask 64512
    %v277 = vsel %vm276, %v200, -inf
    %278 = vmax.xlane.f32.xlu0 %v277
    %v279 = vpop.xlane.xlu0 %278
    %v280 = vsel %vm276, %v273, -inf
    %281 = vmax.xlane.f32.xlu0 %v280
    %v282 = vpop.xlane.xlu0 %281
    %v283 = vsub.f32 %v200, %v279
    %v284 = vsub.f32 %v273, %v282
    %v285 = vmul.f32 %v283, 1.442695
    %v286 = vpow.pop %v285
    %v287 = vmul.f32 %v284, 1.442695
    %v288 = vpow.pop %v287
    %v289 = vsel %vm276, %v286, 0.0
    %290 = vadd.xlane.f32.xlu0 %v289
    %v291 = vpop.xlane.xlu0 %290
    %v292 = vsel %vm276, %v288, 0.0
    %293 = vadd.xlane.f32.xlu0 %v292
    %v294 = vpop.xlane.xlu0 %293
    %v295 = vrcp.pop %v291
    %v296 = vmul.f32 %v286, %v295
    %v297 = vrcp.pop %v294
    %v298 = vmul.f32 %v288, %v297
    %v300 = vsel %vm276, %v296, 0
    %302 = vmatprep.subr.mxu0 0.0
    %303 = vmatpush1.msra.mxu0 0.0
    %304 = vmatprep.subr.mxu0 0.0
    %305 = vmatpush1.msra.mxu0 0.0
    %306 = vmatprep.subr.mxu0 0.0
    %307 = vmatpush1.msra.mxu0 0.0
    %308 = vmatprep.subr.mxu0 0.0
    %309 = vmatpush1.msra.mxu0 0.0
    %310 = vmatprep.subr.mxu0 0.0
    %311 = vmatpush1.msra.mxu0 0.0
    %312 = vmatprep.subr.mxu0 0.0
    %313 = vmatpush1.msra.mxu0 0.0
    %314 = vmatprep.subr.mxu0 0.0
    %315 = vmatpush1.msra.mxu0 0.0
    %316 = vmatprep.subr.mxu0 0.0
    %317 = vmatpush1.msra.mxu0 0.0
    %318 = vmatprep.subr.mxu0 0.0
    %319 = vmatpush1.msra.mxu0 0.0
    %320 = vmatprep.subr.mxu0 0.0
    %321 = vmatpush1.msra.mxu0 0.0
    %322 = vmatprep.subr.mxu0 0.0
    %323 = vmatpush1.msra.mxu0 0.0
    %324 = vmatprep.subr.mxu0 0.0
    %325 = vmatpush1.msra.mxu0 0.0
    %326 = vmatprep.subr.mxu0 0.0
    %327 = vmatpush1.msra.mxu0 0.0
    %328 = vmatprep.subr.mxu0 0.0
    %329 = vmatpush1.msra.mxu0 0.0
    %330 = vmatprep.subr.mxu0 0.0
    %331 = vmatpush1.msra.mxu0 0.0
    %332 = vmatprep.subr.mxu0 0.0
    %333 = vmatpush1.msra.mxu0 %v24
    %334 = vmatprep.subr.mxu0 0.0
    %335 = vmatpush2.msra.mxu0 0.0
    %336 = vmatprep.subr.mxu0 0.0
    %337 = vmatpush2.msra.mxu0 0.0
    %338 = vmatprep.subr.mxu0 0.0
    %339 = vmatpush2.msra.mxu0 0.0
    %340 = vmatprep.subr.mxu0 0.0
    %341 = vmatpush2.msra.mxu0 0.0
    %342 = vmatprep.subr.mxu0 0.0
    %343 = vmatpush2.msra.mxu0 0.0
    %344 = vmatprep.subr.mxu0 0.0
    %345 = vmatpush2.msra.mxu0 0.0
    %346 = vmatprep.subr.mxu0 0.0
    %347 = vmatpush2.msra.mxu0 0.0
    %348 = vmatprep.subr.mxu0 0.0
    %349 = vmatpush2.msra.mxu0 0.0
    %350 = vmatprep.subr.mxu0 0.0
    %351 = vmatpush2.msra.mxu0 0.0
    %352 = vmatprep.subr.mxu0 0.0
    %353 = vmatpush2.msra.mxu0 0.0
    %354 = vmatprep.subr.mxu0 0.0
    %355 = vmatpush2.msra.mxu0 0.0
    %356 = vmatprep.subr.mxu0 0.0
    %357 = vmatpush2.msra.mxu0 0.0
    %358 = vmatprep.subr.mxu0 0.0
    %359 = vmatpush2.msra.mxu0 0.0
    %360 = vmatprep.subr.mxu0 0.0
    %361 = vmatpush2.msra.mxu0 0.0
    %362 = vmatprep.subr.mxu0 0.0
    %363 = vmatpush2.msra.mxu0 0.0
    %364 = vmatprep.subr.mxu0 0.0
    %365 = vmatpush2.msra.mxu0 0.0
    %366 = vmatprep.mubr.f32.mxu0 0.0
    %367 = vmatmul.mubr.f32.gmra.mxu0 %v300
    %v368 = vpop.f32.mrf.mxu0
    %v369 = vadd.f32 0.0, %v368
    %v370 = vpop.f32.mrf.mxu0
    %371 = vdwg.mxu0
    %v373 = vsel %vm276, %v298, 0
    %375 = vmatprep.subr.mxu0 0.0
    %376 = vmatpush1.msra.mxu0 0.0
    %377 = vmatprep.subr.mxu0 0.0
    %378 = vmatpush1.msra.mxu0 0.0
    %379 = vmatprep.subr.mxu0 0.0
    %380 = vmatpush1.msra.mxu0 0.0
    %381 = vmatprep.subr.mxu0 0.0
    %382 = vmatpush1.msra.mxu0 0.0
    %383 = vmatprep.subr.mxu0 0.0
    %384 = vmatpush1.msra.mxu0 0.0
    %385 = vmatprep.subr.mxu0 0.0
    %386 = vmatpush1.msra.mxu0 0.0
    %387 = vmatprep.subr.mxu0 0.0
    %388 = vmatpush1.msra.mxu0 0.0
    %389 = vmatprep.subr.mxu0 0.0
    %390 = vmatpush1.msra.mxu0 0.0
    %391 = vmatprep.subr.mxu0 0.0
    %392 = vmatpush1.msra.mxu0 0.0
    %393 = vmatprep.subr.mxu0 0.0
    %394 = vmatpush1.msra.mxu0 0.0
    %395 = vmatprep.subr.mxu0 0.0
    %396 = vmatpush1.msra.mxu0 0.0
    %397 = vmatprep.subr.mxu0 0.0
    %398 = vmatpush1.msra.mxu0 0.0
    %399 = vmatprep.subr.mxu0 0.0
    %400 = vmatpush1.msra.mxu0 0.0
    %401 = vmatprep.subr.mxu0 0.0
    %402 = vmatpush1.msra.mxu0 0.0
    %403 = vmatprep.subr.mxu0 0.0
    %404 = vmatpush1.msra.mxu0 0.0
    %405 = vmatprep.subr.mxu0 0.0
    %406 = vmatpush1.msra.mxu0 %v25
    %407 = vmatprep.subr.mxu0 0.0
    %408 = vmatpush2.msra.mxu0 0.0
    %409 = vmatprep.subr.mxu0 0.0
    %410 = vmatpush2.msra.mxu0 0.0
    %411 = vmatprep.subr.mxu0 0.0
    %412 = vmatpush2.msra.mxu0 0.0
    %413 = vmatprep.subr.mxu0 0.0
    %414 = vmatpush2.msra.mxu0 0.0
    %415 = vmatprep.subr.mxu0 0.0
    %416 = vmatpush2.msra.mxu0 0.0
    %417 = vmatprep.subr.mxu0 0.0
    %418 = vmatpush2.msra.mxu0 0.0
    %419 = vmatprep.subr.mxu0 0.0
    %420 = vmatpush2.msra.mxu0 0.0
    %421 = vmatprep.subr.mxu0 0.0
    %422 = vmatpush2.msra.mxu0 0.0
    %423 = vmatprep.subr.mxu0 0.0
    %424 = vmatpush2.msra.mxu0 0.0
    %425 = vmatprep.subr.mxu0 0.0
    %426 = vmatpush2.msra.mxu0 0.0
    %427 = vmatprep.subr.mxu0 0.0
    %428 = vmatpush2.msra.mxu0 0.0
    %429 = vmatprep.subr.mxu0 0.0
    %430 = vmatpush2.msra.mxu0 0.0
    %431 = vmatprep.subr.mxu0 0.0
    %432 = vmatpush2.msra.mxu0 0.0
    %433 = vmatprep.subr.mxu0 0.0
    %434 = vmatpush2.msra.mxu0 0.0
    %435 = vmatprep.subr.mxu0 0.0
    %436 = vmatpush2.msra.mxu0 0.0
    %437 = vmatprep.subr.mxu0 0.0
    %438 = vmatpush2.msra.mxu0 0.0
    %439 = vmatprep.mubr.f32.mxu0 0.0
    %440 = vmatmul.mubr.f32.gmra.mxu0 %v373
    %v441 = vpop.f32.mrf.mxu0
    %v442 = vadd.f32 0.0, %v441
    %v443 = vpop.f32.mrf.mxu0
    %444 = vdwg.mxu0
    %445 = vst.msk [vmem:[#allocation2] sm:$0xff] %vm129, %v369
    %446 = vst.msk [vmem:[#allocation2 + $0x8] sm:$0xff] %vm129, %v442
    %v449 = vrot.slane %v25, 7
    %vm452 = vcmask 261127
    %453 = vst.msk [vmem:[#allocation4 - $0x7] sm:$0x80] %vm452, %v24
    %vm454 = vcmask 253952
    %455 = vst.msk [vmem:[#allocation4 + $0x1] sm:$0x1] %vm454, %v449
    // Predicated region
    $region22: #{tpu_custom_call.1} parent=1 // pred_check
      _
    $region23: #{tpu_custom_call.1} parent=1 // pred_check_branch
      %457 = sbr.rel (0) target = $region25
    $region24: #{tpu_custom_call.1} parent=1 // pred_region
      %s459 = ssub.s32 256, 256
      %460 = vsyncadd [#allocation3], %s459
      %s461 = sshll.u32 [#allocation2], 4
      %s462 = int_to_ptr.vmem [resolvable:$true] %s461
      %467 = dma.vmem_to_hbm [thread:$0]  %s462, 256, %s5, [#allocation3], 128, 128, 8
    $region25: #{tpu_custom_call.1} parent=1 // pred_fallthru
      _
    // Predicated region
    $region26: #{tpu_custom_call.1} parent=1 // pred_check
      _
    $region27: #{tpu_custom_call.1} parent=1 // pred_check_branch
      %469 = sbr.rel (0) target = $region29
    $region28: #{tpu_custom_call.1} parent=1 // pred_region
      %s471 = ssub.s32 32, 32
      %472 = vsyncadd [#allocation5], %s471
      %s474 = sshll.u32 [#allocation4], 4
      %s475 = int_to_ptr.vmem [resolvable:$true] %s474
      %477 = dma.vmem_to_hbm [thread:$0]  %s475, 32, %s6, [#allocation5]
    $region29: #{tpu_custom_call.1} parent=1 // pred_fallthru
      _
    // Predicated region
    $region30: #{tpu_custom_call.1} parent=1 // pred_check
      _
    $region31: #{tpu_custom_call.1} parent=1 // pred_check_branch
      %479 = sbr.rel (0) target = $region33
    $region32: #{tpu_custom_call.1} parent=1 // pred_region
      %480 = dma.done [#allocation3], 256
    $region33: #{tpu_custom_call.1} parent=1 // pred_fallthru
      _
    // Predicated region
    $region34: #{tpu_custom_call.1} parent=1 // pred_check
      _
    $region35: #{tpu_custom_call.1} parent=1 // pred_check_branch
      %482 = sbr.rel (0) target = $region37
    $region36: #{tpu_custom_call.1} parent=1 // pred_region
      %483 = dma.done [#allocation5], 32
    $region37: #{tpu_custom_call.1} parent=1 // pred_fallthru
      _
    %484 = vsyncpa [#allocation3], 1
    %485 = vsyncpa [#allocation5], 1

</llo_original>
